<compile_context>
chip_gen: v5e
topology: v5e:2x2
jax: 0.10.0
libtpu: 0.0.40
codegen_flags: <defaults>
</compile_context>

<pallas_src>
import jax
import jax.numpy as jnp
from jax import lax
from jax.experimental import pallas as pl
from jax.experimental.pallas import tpu as pltpu

PADDING_IDX = 0
VMEM_TABLE_BYTES_LIMIT = 4 * 1024 * 1024  # keep the table VMEM-resident below this


def _round_up(x, m):
    return ((x + m - 1) // m) * m


def _padded_vmem_bytes(shape, dtype):
    """VMEM footprint of a 2-D buffer after (8, 128) layout padding."""
    r, c = shape
    return _round_up(r, 8) * _round_up(c, 128) * jnp.dtype(dtype).itemsize


# ----------------------------------------------------------------------------- kernels


def _make_vmem_gather_kernel(tile_n):
    """Small-vocab path: the (V, E) embedding table is VMEM-resident."""

    def kernel(ids_ref, table_ref, w_ref, out_ref, emb_ref):
        # ids_ref:   (n_pad,) int32 in SMEM (scalar prefetch)
        # table_ref: (V, E) VMEM-resident embedding table
        # w_ref:     (E, P_pad) pre-transposed projection weight (resident across grid)
        # out_ref:   (tile_n, P_pad) lane-dense output tile
        # emb_ref:   (tile_n, E) VMEM scratch holding the gathered rows
        base = pl.program_id(0) * tile_n

        def gather_row(j, carry):
            idx = ids_ref[base + j]
            emb_ref[pl.ds(j, 1), :] = table_ref[pl.ds(idx, 1), :]
            return carry

        if tile_n <= 32:
            for j in range(tile_n):        # fully unrolled at trace time
                gather_row(j, 0)
        else:
            lax.fori_loop(0, tile_n, gather_row, 0, unroll=8)

        out_ref[...] = jnp.dot(
            emb_ref[...], w_ref[...], preferred_element_type=jnp.float32
        ).astype(out_ref.dtype)
        # TODO(synk): training-mode dropout (p>0) would mask+rescale here via
        # pltpu.prng_seed / pltpu.prng_random_bits; p=0 (and eval) is the identity.

    return kernel


def _make_hbm_gather_kernel(tile_n, n_buf):
    """Large-vocab path: table stays in HBM; manual row DMAs, n_buf in flight."""

    def kernel(ids_ref, table_hbm, w_ref, out_ref, emb_ref, sem_ref):
        base = pl.program_id(0) * tile_n

        def start(j):
            idx = ids_ref[base + j]
            pltpu.make_async_copy(
                table_hbm.at[pl.ds(idx, 1), :],
                emb_ref.at[pl.ds(j, 1), :],
                sem_ref.at[j % n_buf],
            ).start()
            # TODO(synk): skip the DMA (zero the row) when idx == PADDING_IDX and
            # dedup repeated ids to save issue slots on padding-heavy batches.

        def wait(j):
            pltpu.make_async_copy(
                table_hbm.at[pl.ds(0, 1), :],   # only shape / semaphore matter for wait
                emb_ref.at[pl.ds(j, 1), :],
                sem_ref.at[j % n_buf],
            ).wait()

        # Prime the DMA ring.
        for j in range(n_buf):
            start(j)

        # Steady state: retire row j, immediately issue row j + n_buf.
        def steady(j, carry):
            wait(j)
            start(j + n_buf)
            return carry

        lax.fori_loop(0, tile_n - n_buf, steady, 0)

        # Drain the ring.
        def drain(j, carry):
            wait(j)
            return carry

        lax.fori_loop(tile_n - n_buf, tile_n, drain, 0)

        out_ref[...] = jnp.dot(
            emb_ref[...], w_ref[...], preferred_element_type=jnp.float32
        ).astype(out_ref.dtype)

    return kernel


# ----------------------------------------------------------------------------- wrapper


def prepare_embed_params(table_f32, proj_weight_f32, *, lane=128):
    """One-time parameter prep (done ONCE, not per forward call).

    table_f32:       (V, E) f32  nn.Embedding(vocab_size, size, padding_idx=0).weight
    proj_weight_f32: (P, E) f32  nn.Linear(size, project_size, bias=False).weight
    Returns the table with the padding row zeroed, the transposed & lane-padded
    projection weight (E, P_pad), and the true project_size P.
    """
    V, E = table_f32.shape
    P, E2 = proj_weight_f32.shape
    assert E == E2
    table = table_f32.at[PADDING_IDX].set(0.0)         # nn.Embedding padding_idx row
    p_pad = _round_up(P, lane)
    w_t = jnp.zeros((E, p_pad), table_f32.dtype).at[:, :P].set(proj_weight_f32.T)
    return table, w_t, P


def embed_forward(ids, table, w_t, project_size, *, force_hbm_gather=False):
    """ids: (B, S) int; table: (V, E); w_t: (E, P_pad) -> (B, S, project_size) f32."""
    B, S = ids.shape
    V, E = table.shape
    p_pad = w_t.shape[1]
    out_dtype = jnp.float32

    # ---- token tiling -------------------------------------------------------
    N = B * S
    n_pad8 = _round_up(N, 8)
    tile_n = min(256, n_pad8)
    # Keep >= 2 token tiles when possible so the "parallel" grid axis can shard
    # across v7x's two TensorCores (neutral on single-TC v5e / v6e).
    if n_pad8 // tile_n < 2 and n_pad8 >= 16:
        tile_n = _round_up(-(-n_pad8 // 2), 8)
    n_pad = _round_up(N, tile_n)
    n_tiles = n_pad // tile_n

    # ids are control data: flatten, clamp for index/DMA safety (PyTorch would
    # error on out-of-range ids), pad with the padding index, prefetch into SMEM.
    # TODO(synk): for very large B*S, DMA per-tile id chunks into SMEM instead of
    # prefetching the whole (n_pad,) vector.
    ids_flat = jnp.clip(ids.reshape(-1), 0, V - 1).astype(jnp.int32)
    ids_flat = jnp.pad(ids_flat, (0, n_pad - N), constant_values=PADDING_IDX)

    use_vmem_table = (not force_hbm_gather) and (
        _padded_vmem_bytes((V, E), table.dtype) <= VMEM_TABLE_BYTES_LIMIT)

    # VMEM budget from actual (layout-padded) buffer sizes + pipeline double
    # buffering, so the limit is explicit on v7x's 64 MiB parts.
    vmem_bytes = (
        2 * _padded_vmem_bytes((E, p_pad), w_t.dtype)          # resident W
        + 2 * _padded_vmem_bytes((tile_n, p_pad), out_dtype)   # output tile
        + _padded_vmem_bytes((tile_n, E), table.dtype)         # gather scratch
    )
    if use_vmem_table:
        vmem_bytes += 2 * _padded_vmem_bytes((V, E), table.dtype)
    vmem_limit = int(min(max(2 * vmem_bytes, 16 * 1024 * 1024), 100 * 1024 * 1024))

    compiler_params = pltpu.CompilerParams(
        dimension_semantics=("parallel",),
        vmem_limit_bytes=vmem_limit,
    )
    out_shape = jax.ShapeDtypeStruct((n_pad, p_pad), out_dtype)
    out_spec = pl.BlockSpec((tile_n, p_pad), lambda t, ids: (t, 0))
    w_spec = pl.BlockSpec((E, p_pad), lambda t, ids: (0, 0))  # resident across grid

    if use_vmem_table:
        grid_spec = pltpu.PrefetchScalarGridSpec(
            num_scalar_prefetch=1,
            grid=(n_tiles,),
            in_specs=[
                pl.BlockSpec((V, E), lambda t, ids: (0, 0)),   # whole table in VMEM
                w_spec,
            ],
            out_specs=out_spec,
            scratch_shapes=[pltpu.VMEM((tile_n, E), table.dtype)],
        )
        kernel = _make_vmem_gather_kernel(tile_n)
    else:
        n_buf = min(8, tile_n)                                 # row DMAs in flight
        grid_spec = pltpu.PrefetchScalarGridSpec(
            num_scalar_prefetch=1,
            grid=(n_tiles,),
            in_specs=[
                pl.BlockSpec(memory_space=pl.ANY),             # table stays in HBM
                w_spec,
            ],
            out_specs=out_spec,
            scratch_shapes=[
                pltpu.VMEM((tile_n, E), table.dtype),
                pltpu.SemaphoreType.DMA((n_buf,)),
            ],
        )
        kernel = _make_hbm_gather_kernel(tile_n, n_buf)
        # TODO(synk): for very large E * P_pad, also tile W columns (extra
        # "parallel" grid axis) so the resident W fits v7x's 64 MiB VMEM.

    out = pl.pallas_call(
        kernel,
        out_shape=out_shape,
        grid_spec=grid_spec,
        compiler_params=compiler_params,
    )(ids_flat, table, w_t)

    return out[:N, :project_size].reshape(B, S, project_size)


# ----------------------------------------------------------------------------- demo


if __name__ == "__main__":
    # Small shapes consistent with the module's forward:
    #   batch=2, seq=8, vocab_size=32, size (embed dim E)=32, project_size=16
    B, S = 2, 8
    V, E, P = 32, 32, 16

    key = jax.random.PRNGKey(0)
    k_tab, k_proj, k_ids = jax.random.split(key, 3)

    # nn.Embedding init ~ N(0,1); the padding row is zeroed in prepare_embed_params.
    table = jax.random.normal(k_tab, (V, E), dtype=jnp.float32)

    # nn.Linear(E, P, bias=False).weight: shape (P, E), U(-1/sqrt(E), 1/sqrt(E)).
    bound = 1.0 / (E ** 0.5)
    proj_weight = jax.random.uniform(
        k_proj, (P, E), dtype=jnp.float32, minval=-bound, maxval=bound)

    # Token ids, including a padding token to exercise padding_idx semantics.
    ids = jax.random.randint(k_ids, (B, S), 0, V, dtype=jnp.int32)
    ids = ids.at[0, 0].set(PADDING_IDX)

    table_p, w_t, p_out = prepare_embed_params(table, proj_weight)

    # Small-vocab fast path (VMEM-resident table).
    out_vmem = embed_forward(ids, table_p, w_t, p_out)
    # Large-vocab path (HBM table + manual multi-in-flight DMA gather), forced so
    # both code paths are exercised.
    out_hbm = embed_forward(ids, table_p, w_t, p_out, force_hbm_gather=True)
    out_vmem, out_hbm = jax.block_until_ready((out_vmem, out_hbm))

    # Pure-JAX f32 reference (gather + highest-precision matmul), same parameters.
    emb_ref = jnp.take(table_p, ids.reshape(-1), axis=0)
    ref = jnp.dot(emb_ref, w_t[:, :P],
                  precision=lax.Precision.HIGHEST).reshape(B, S, P)

    for out in (out_vmem, out_hbm):
        assert out.shape == (B, S, P)
        # Tolerance covers MXU-vs-XLA f32 matmul rounding-mode differences while
        # still catching any gather / wiring bug (those produce O(1) errors).
        assert jnp.allclose(out, ref, atol=5e-3, rtol=5e-3), \
            float(jnp.max(jnp.abs(out - ref)))
        # padding_idx: the padded token must produce an exactly-zero output row.
        assert bool(jnp.all(out[0, 0] == 0.0))

    print("KERNEL_OK")
</pallas_src>

<mosaic_0001>
module attributes {stable_mosaic.version = 11 : i64} {
  func.func @kernel(%arg0: i32, %arg1: memref<16xi32, #tpu.memory_space<smem>>, %arg2: memref<32x32xf32, #tpu.memory_space<vmem>>, %arg3: memref<32x128xf32, #tpu.memory_space<vmem>>, %arg4: memref<8x128xf32, #tpu.memory_space<vmem>>, %arg5: memref<8x32xf32, #tpu.memory_space<vmem>>) attributes {dimension_semantics = [#tpu.dimension_semantics<parallel>], iteration_bounds = array<i64: 2>, scalar_prefetch = 1 : i64, scratch_operands = 1 : i64, tpu.core_type = #tpu.core_type<tc>, window_params = [{pipeline_mode = #tpu.pipeline_mode<synchronous>, transform_indices = @transform_0, window_bounds = array<i64: 32, 32>}, {pipeline_mode = #tpu.pipeline_mode<synchronous>, transform_indices = @transform_1, window_bounds = array<i64: 32, 128>}, {transform_indices = @transform_2, window_bounds = array<i64: 8, 128>}]} {
    %c8_i32 = arith.constant 8 : i32
    %0 = arith.muli %arg0, %c8_i32 : i32
    %c0_i32 = arith.constant 0 : i32
    %1 = arith.addi %0, %c0_i32 : i32
    %2 = arith.index_cast %1 : i32 to index
    %3 = memref.load %arg1[%2] : memref<16xi32, #tpu.memory_space<smem>>
    %4 = arith.index_cast %3 : i32 to index
    %c0 = arith.constant 0 : index
    %5 = vector.load %arg2[%4, %c0] : memref<32x32xf32, #tpu.memory_space<vmem>>, vector<1x32xf32>
    %c0_0 = arith.constant 0 : index
    %c0_1 = arith.constant 0 : index
    %6 = vector.load %arg5[%c0_0, %c0_1] : memref<8x32xf32, #tpu.memory_space<vmem>>, vector<1x32xf32>
    tpu.vector_store %arg5[%c0_0, %c0_1], %5 {strides = array<i32>} : memref<8x32xf32, #tpu.memory_space<vmem>>, vector<1x32xf32>,
    %c1_i32 = arith.constant 1 : i32
    %7 = arith.addi %0, %c1_i32 : i32
    %8 = arith.index_cast %7 : i32 to index
    %9 = memref.load %arg1[%8] : memref<16xi32, #tpu.memory_space<smem>>
    %10 = arith.index_cast %9 : i32 to index
    %c0_2 = arith.constant 0 : index
    %11 = vector.load %arg2[%10, %c0_2] : memref<32x32xf32, #tpu.memory_space<vmem>>, vector<1x32xf32>
    %c1 = arith.constant 1 : index
    %c0_3 = arith.constant 0 : index
    %12 = vector.load %arg5[%c1, %c0_3] : memref<8x32xf32, #tpu.memory_space<vmem>>, vector<1x32xf32>
    tpu.vector_store %arg5[%c1, %c0_3], %11 {strides = array<i32>} : memref<8x32xf32, #tpu.memory_space<vmem>>, vector<1x32xf32>,
    %c2_i32 = arith.constant 2 : i32
    %13 = arith.addi %0, %c2_i32 : i32
    %14 = arith.index_cast %13 : i32 to index
    %15 = memref.load %arg1[%14] : memref<16xi32, #tpu.memory_space<smem>>
    %16 = arith.index_cast %15 : i32 to index
    %c0_4 = arith.constant 0 : index
    %17 = vector.load %arg2[%16, %c0_4] : memref<32x32xf32, #tpu.memory_space<vmem>>, vector<1x32xf32>
    %c2 = arith.constant 2 : index
    %c0_5 = arith.constant 0 : index
    %18 = vector.load %arg5[%c2, %c0_5] : memref<8x32xf32, #tpu.memory_space<vmem>>, vector<1x32xf32>
    tpu.vector_store %arg5[%c2, %c0_5], %17 {strides = array<i32>} : memref<8x32xf32, #tpu.memory_space<vmem>>, vector<1x32xf32>,
    %c3_i32 = arith.constant 3 : i32
    %19 = arith.addi %0, %c3_i32 : i32
    %20 = arith.index_cast %19 : i32 to index
    %21 = memref.load %arg1[%20] : memref<16xi32, #tpu.memory_space<smem>>
    %22 = arith.index_cast %21 : i32 to index
    %c0_6 = arith.constant 0 : index
    %23 = vector.load %arg2[%22, %c0_6] : memref<32x32xf32, #tpu.memory_space<vmem>>, vector<1x32xf32>
    %c3 = arith.constant 3 : index
    %c0_7 = arith.constant 0 : index
    %24 = vector.load %arg5[%c3, %c0_7] : memref<8x32xf32, #tpu.memory_space<vmem>>, vector<1x32xf32>
    tpu.vector_store %arg5[%c3, %c0_7], %23 {strides = array<i32>} : memref<8x32xf32, #tpu.memory_space<vmem>>, vector<1x32xf32>,
    %c4_i32 = arith.constant 4 : i32
    %25 = arith.addi %0, %c4_i32 : i32
    %26 = arith.index_cast %25 : i32 to index
    %27 = memref.load %arg1[%26] : memref<16xi32, #tpu.memory_space<smem>>
    %28 = arith.index_cast %27 : i32 to index
    %c0_8 = arith.constant 0 : index
    %29 = vector.load %arg2[%28, %c0_8] : memref<32x32xf32, #tpu.memory_space<vmem>>, vector<1x32xf32>
    %c4 = arith.constant 4 : index
    %c0_9 = arith.constant 0 : index
    %30 = vector.load %arg5[%c4, %c0_9] : memref<8x32xf32, #tpu.memory_space<vmem>>, vector<1x32xf32>
    tpu.vector_store %arg5[%c4, %c0_9], %29 {strides = array<i32>} : memref<8x32xf32, #tpu.memory_space<vmem>>, vector<1x32xf32>,
    %c5_i32 = arith.constant 5 : i32
    %31 = arith.addi %0, %c5_i32 : i32
    %32 = arith.index_cast %31 : i32 to index
    %33 = memref.load %arg1[%32] : memref<16xi32, #tpu.memory_space<smem>>
    %34 = arith.index_cast %33 : i32 to index
    %c0_10 = arith.constant 0 : index
    %35 = vector.load %arg2[%34, %c0_10] : memref<32x32xf32, #tpu.memory_space<vmem>>, vector<1x32xf32>
    %c5 = arith.constant 5 : index
    %c0_11 = arith.constant 0 : index
    %36 = vector.load %arg5[%c5, %c0_11] : memref<8x32xf32, #tpu.memory_space<vmem>>, vector<1x32xf32>
    tpu.vector_store %arg5[%c5, %c0_11], %35 {strides = array<i32>} : memref<8x32xf32, #tpu.memory_space<vmem>>, vector<1x32xf32>,
    %c6_i32 = arith.constant 6 : i32
    %37 = arith.addi %0, %c6_i32 : i32
    %38 = arith.index_cast %37 : i32 to index
    %39 = memref.load %arg1[%38] : memref<16xi32, #tpu.memory_space<smem>>
    %40 = arith.index_cast %39 : i32 to index
    %c0_12 = arith.constant 0 : index
    %41 = vector.load %arg2[%40, %c0_12] : memref<32x32xf32, #tpu.memory_space<vmem>>, vector<1x32xf32>
    %c6 = arith.constant 6 : index
    %c0_13 = arith.constant 0 : index
    %42 = vector.load %arg5[%c6, %c0_13] : memref<8x32xf32, #tpu.memory_space<vmem>>, vector<1x32xf32>
    tpu.vector_store %arg5[%c6, %c0_13], %41 {strides = array<i32>} : memref<8x32xf32, #tpu.memory_space<vmem>>, vector<1x32xf32>,
    %c7_i32 = arith.constant 7 : i32
    %43 = arith.addi %0, %c7_i32 : i32
    %44 = arith.index_cast %43 : i32 to index
    %45 = memref.load %arg1[%44] : memref<16xi32, #tpu.memory_space<smem>>
    %46 = arith.index_cast %45 : i32 to index
    %c0_14 = arith.constant 0 : index
    %47 = vector.load %arg2[%46, %c0_14] : memref<32x32xf32, #tpu.memory_space<vmem>>, vector<1x32xf32>
    %c7 = arith.constant 7 : index
    %c0_15 = arith.constant 0 : index
    %48 = vector.load %arg5[%c7, %c0_15] : memref<8x32xf32, #tpu.memory_space<vmem>>, vector<1x32xf32>
    tpu.vector_store %arg5[%c7, %c0_15], %47 {strides = array<i32>} : memref<8x32xf32, #tpu.memory_space<vmem>>, vector<1x32xf32>,
    %c0_16 = arith.constant 0 : index
    %c0_17 = arith.constant 0 : index
    %49 = vector.load %arg5[%c0_16, %c0_17] : memref<8x32xf32, #tpu.memory_space<vmem>>, vector<8x32xf32>
    %c0_18 = arith.constant 0 : index
    %c0_19 = arith.constant 0 : index
    %50 = vector.load %arg3[%c0_18, %c0_19] : memref<32x128xf32, #tpu.memory_space<vmem>>, vector<32x128xf32>
    %cst = arith.constant dense<0.000000e+00> : vector<8x128xf32>
    %51 = tpu.matmul %49, %50, %cst {dimension_numbers = #tpu.dot_dimension_numbers<[1], [0], [0], [1], [0, 0, 1, 1], [], []>} : vector<8x32xf32>, vector<32x128xf32>, vector<8x128xf32> -> vector<8x128xf32>
    %c0_20 = arith.constant 0 : index
    %c0_21 = arith.constant 0 : index
    %52 = vector.load %arg4[%c0_20, %c0_21] : memref<8x128xf32, #tpu.memory_space<vmem>>, vector<8x128xf32>
    tpu.vector_store %arg4[%c0_20, %c0_21], %51 {strides = array<i32>} : memref<8x128xf32, #tpu.memory_space<vmem>>, vector<8x128xf32>,
    return
  }
  func.func @transform_0(%arg0: i32, %arg1: memref<16xi32, #tpu.memory_space<smem>>) -> (i32, i32) {
    %c0_i32 = arith.constant 0 : i32
    %c0_i32_0 = arith.constant 0 : i32
    %c0_i32_1 = arith.constant 0 : i32
    return %c0_i32, %c0_i32_0 : i32, i32
  }
  func.func @transform_1(%arg0: i32, %arg1: memref<16xi32, #tpu.memory_space<smem>>) -> (i32, i32) {
    %c0_i32 = arith.constant 0 : i32
    %c0_i32_0 = arith.constant 0 : i32
    %c0_i32_1 = arith.constant 0 : i32
    return %c0_i32, %c0_i32_0 : i32, i32
  }
  func.func @transform_2(%arg0: i32, %arg1: memref<16xi32, #tpu.memory_space<smem>>) -> (i32, i32) {
    %c0_i32 = arith.constant 0 : i32
    %c0_i32_0 = arith.constant 0 : i32
    return %arg0, %c0_i32 : i32, i32
  }
}

</mosaic_0001>

<llo_original>
// kernel: tpu_custom_call.1
$region0: #{tpu_custom_call.1}
  #allocation0 [shape = 'u32[]', space=smem, size = 0x4, offset = 0x4, fixed_abs, tag = 'smem constant byte address 0x4 - core index']
  #allocation1 [shape = 'u32[72,128]{1,0:T(1,128)}', space=vmem, size = 0x9000, scoped, tag = 'internal scratch']
  #allocation2 [shape = 'f32[8,32]{1,0:T(8,128)}', space=vmem, size = 0x1000, scoped, tag = 'scratch operand']
  #allocation3 [shape = 's32[1]{0}', space=sflag, size = 0x4, scoped, tag = 'scoped memory for tpu_custom_call.1']
  #allocation4 [shape = 'u8[512]{0}', space=smem, size = 0x200, scoped, tag = 'prefetched SMEM operand 0']
  %s0 = inlined_call_operand.hbm [shape: s32[16], index: 0, kind: input, shape index: {}]
  %s1 = inlined_call_operand.hbm [shape: f32[32,32], index: 1, kind: input, shape index: {}]
  %s2 = inlined_call_operand.hbm [shape: f32[32,128], index: 2, kind: input, shape index: {}]
  %s3 = inlined_call_operand.hbm [shape: f32[16,128], index: 3, kind: output, shape index: {}]
  %s4 = sld [smem:[#allocation0]]
  $region49: #{tpu_custom_call.1} parent=0
    _
  %s6 = ssub.s32 1, %s4
  %s7 = scalar_select 0, %s6, %s4
  %s9 = sshll.u32 %s0, 4
  %s10 = int_to_ptr.hbm [resolvable:$true] %s9
  %12 = dma.hbm_to_smem %s10, 16, [#allocation4], [#allocation3]
  %14 = dma.done [#allocation3], 16
  %15 = sfence
  $region1: #{tpu_custom_call.1} parent=0
    #allocation5 [shape = 'u8[16384]{0}', space=vmem, size = 0x4000, scoped, tag = 'input window, operand 1, single buffered']
    #allocation6 [shape = 's32[2]{0}', space=sflag, size = 0x8, scoped, tag = 'scoped memory for tpu_custom_call.1']
    #allocation7 [shape = 's32[2]{0}', space=sflag, size = 0x8, scoped, tag = 'scoped memory for tpu_custom_call.1']
    #allocation8 [shape = 'u8[16384]{0}', space=vmem, size = 0x4000, scoped, tag = 'input window, operand 2, single buffered']
    #allocation9 [shape = 's32[1]{0}', space=sflag, size = 0x4, scoped, tag = 'scoped memory for tpu_custom_call.1']
    #allocation10 [shape = 'u8[8192]{0}', space=vmem, size = 0x2000, scoped, tag = 'output window, operand 0']
    %16 = vsyncpa [#allocation6], 0
    %17 = vsyncpa [#allocation9], 0
    %18 = vsyncpa [#allocation7], 0
    %s19 = scalar_lea.sflag [#allocation7], 1
    %20 = vsyncpa %s19, 0
    loop: start=0, step=1, limit=4
    $region2: #{tpu_custom_call.1} parent=1 // loop_pre_header
      _
    $region3: #{tpu_custom_call.1} parent=1 // loop_header
      %s22 = sphi 0, %s26
      %p23 = scmp.ge.s32.totalorder %s22, 4
      %s30 = sphi 0, %s30
      %s32 = sphi 0, %s30
      %s33 = sphi 0, %s32
      %s47 = sphi 0, %s33
      %s51 = sphi 0, %s51
      %s53 = sphi 0, %s51
      %s54 = sphi 0, %s53
      %s68 = sphi 0, %s54
      %s74 = sphi 0, %s76
      %s77 = sphi 0, %s74
      %s78 = sphi 0, %s77
      %s94 = sphi 0, %s78
    $region4: #{tpu_custom_call.1} parent=1 // loop_header_branch
      %25 = sbr.rel (%p23) target = $region8
    $region5: #{tpu_custom_call.1} parent=1 // loop_body
      %s27 = ssub.s32 %s22, 1
      %s28 = ssub.s32 %s22, 2
      %s29 = sadd.s32 %s22, 1
      %s31 = sadd.s32 %s30, 1
      %p34 = scmp.eq.s32.totalorder %s22, 1
      %p35 = scmp.ne.s32.totalorder %s30, %s32
      %p36 = scmp.eq.s32.totalorder %s22, 0
      %p37 = por %p35, %p36
      %p38 = scmp.ne.s32.totalorder %s30, %s32
      %p39 = scmp.eq.s32.totalorder %s27, 1
      %p40 = por %p38, %p39
      %p41 = scmp.ne.s32.totalorder %s32, %s33
      %p42 = scmp.eq.s32.totalorder %s27, 0
      %p43 = por %p41, %p42
      %p44 = scmp.ne.s32.totalorder %s32, %s33
      %p45 = scmp.eq.s32.totalorder %s28, 1
      %p46 = por %p44, %p45
      %p48 = scmp.ne.s32.totalorder %s33, %s47
      %p49 = scmp.eq.s32.totalorder %s28, 0
      %p50 = por %p48, %p49
      %s52 = sadd.s32 %s51, 1
      %p55 = scmp.eq.s32.totalorder %s22, 1
      %p56 = scmp.ne.s32.totalorder %s51, %s53
      %p57 = scmp.eq.s32.totalorder %s22, 0
      %p58 = por %p56, %p57
      %p59 = scmp.ne.s32.totalorder %s51, %s53
      %p60 = scmp.eq.s32.totalorder %s27, 1
      %p61 = por %p59, %p60
      %p62 = scmp.ne.s32.totalorder %s53, %s54
      %p63 = scmp.eq.s32.totalorder %s27, 0
      %p64 = por %p62, %p63
      %p65 = scmp.ne.s32.totalorder %s53, %s54
      %p66 = scmp.eq.s32.totalorder %s28, 1
      %p67 = por %p65, %p66
      %p69 = scmp.ne.s32.totalorder %s54, %s68
      %p70 = scmp.eq.s32.totalorder %s28, 0
      %p71 = por %p69, %p70
      %s72 = ssub.s32 %s22, %s29
      %p73 = scmp.eq.s32.totalorder %s72, 0
      %s75 = sadd.s32 %s74, 1
      %s76 = scalar_select %p73, %s74, %s75
      %p79 = pneg %p73
      %p80 = scmp.eq.s32.totalorder %s22, 1
      %p81 = por %p79, %p80
      %p82 = scmp.ne.s32.totalorder %s74, %s77
      %p83 = scmp.eq.s32.totalorder %s22, 0
      %p84 = por %p82, %p83
      %p85 = scmp.ne.s32.totalorder %s74, %s77
      %p86 = scmp.eq.s32.totalorder %s27, 1
      %p87 = por %p85, %p86
      %p88 = scmp.ne.s32.totalorder %s77, %s78
      %p89 = scmp.eq.s32.totalorder %s27, 0
      %p90 = por %p88, %p89
      %p91 = scmp.ne.s32.totalorder %s77, %s78
      %p92 = scmp.eq.s32.totalorder %s28, 1
      %p93 = por %p91, %p92
      %p95 = scmp.ne.s32.totalorder %s78, %s94
      %p96 = scmp.eq.s32.totalorder %s28, 0
      %p97 = por %p95, %p96
      %p98 = scmp.le.s32.totalorder 1, %s22
      %p99 = scmp.lt.s32.totalorder %s22, 3
      %p100 = pnand %p98, %p99
      %p101 = pneg %p100
      // Predicated region
      $region9: #{tpu_custom_call.1} parent=5 // pred_check
        _
      $region10: #{tpu_custom_call.1} parent=5 // pred_check_branch
        %103 = sbr.rel (%p100) target = $region12
      $region11: #{tpu_custom_call.1} parent=5 // pred_region
        %s104 = ssub.s32 %s22, 1
        // Predicated region
        $region13: #{tpu_custom_call.1} parent=11 // pred_check
          %p105 = pneg %p43
        $region14: #{tpu_custom_call.1} parent=11 // pred_check_branch
          %107 = sbr.rel (%p105) target = $region16
        $region15: #{tpu_custom_call.1} parent=11 // pred_region
          %109 = vsyncadd [#allocation6], 0
          %s110 = sshll.u32 %s1, 4
          %s111 = int_to_ptr.hbm [resolvable:$true] %s110
          %s112 = sshll.u32 [#allocation5], 4
          %s113 = int_to_ptr.vmem [resolvable:$true] %s112
          %118 = dma.hbm_to_vmem [thread:$0]  %s111, 512, %s113, [#allocation6], 128, 128, 8
        $region16: #{tpu_custom_call.1} parent=11 // pred_fallthru
          _
        // Predicated region
        $region17: #{tpu_custom_call.1} parent=11 // pred_check
          %p119 = pneg %p64
        $region18: #{tpu_custom_call.1} parent=11 // pred_check_branch
          %121 = sbr.rel (%p119) target = $region20
        $region19: #{tpu_custom_call.1} parent=11 // pred_region
          %123 = vsyncadd [#allocation9], 0
          %s124 = sshll.u32 %s2, 4
          %s125 = int_to_ptr.hbm [resolvable:$true] %s124
          %s126 = sshll.u32 [#allocation8], 4
          %s127 = int_to_ptr.vmem [resolvable:$true] %s126
          %132 = dma.hbm_to_vmem [thread:$0]  %s125, 512, %s127, [#allocation9], 128, 128, 8
        $region20: #{tpu_custom_call.1} parent=11 // pred_fallthru
          _
      $region12: #{tpu_custom_call.1} parent=5 // pred_fallthru
        _
      %p133 = scmp.lt.s32.totalorder %s22, 2
      // Predicated region
      $region21: #{tpu_custom_call.1} parent=5 // pred_check
        %p134 = pneg %p133
      $region22: #{tpu_custom_call.1} parent=5 // pred_check_branch
        %136 = sbr.rel (%p134) target = $region24
      $region23: #{tpu_custom_call.1} parent=5 // pred_region
        _
      $region24: #{tpu_custom_call.1} parent=5 // pred_fallthru
        _
      %p137 = scmp.le.s32.totalorder 1, %s22
      %p138 = scmp.lt.s32.totalorder %s22, 3
      %p139 = pnand %p137, %p138
      %p140 = pneg %p139
      // Predicated region
      $region25: #{tpu_custom_call.1} parent=5 // pred_check
        _
      $region26: #{tpu_custom_call.1} parent=5 // pred_check_branch
        %142 = sbr.rel (%p139) target = $region28
      $region27: #{tpu_custom_call.1} parent=5 // pred_region
        %s143 = ssub.s32 %s22, 1
        // Predicated region
        $region29: #{tpu_custom_call.1} parent=27 // pred_check
          %p144 = pneg %p43
        $region30: #{tpu_custom_call.1} parent=27 // pred_check_branch
          %146 = sbr.rel (%p144) target = $region32
        $region31: #{tpu_custom_call.1} parent=27 // pred_region
          %148 = dma.done [#allocation6], 512
        $region32: #{tpu_custom_call.1} parent=27 // pred_fallthru
          _
        // Predicated region
        $region33: #{tpu_custom_call.1} parent=27 // pred_check
          %p149 = pneg %p64
        $region34: #{tpu_custom_call.1} parent=27 // pred_check_branch
          %151 = sbr.rel (%p149) target = $region36
        $region35: #{tpu_custom_call.1} parent=27 // pred_region
          %153 = dma.done [#allocation9], 512
        $region36: #{tpu_custom_call.1} parent=27 // pred_fallthru
          _
        %p154 = pneg %p43
        %p155 = pneg %p40
        %p156 = pneg %p64
        %p157 = pneg %p61
        %p158 = pneg %p90
        %p159 = pneg %p87
        %s160 = sand.u32 %s77, 1
        %s161 = scalar_lea.sflag [#allocation7], %s160
        %s162 = sand.u32 %s77, 1
        %s163 = smul.addr %s162, 8
        %s164 = scalar_lea.vmem [#allocation10], %s163
        %s165 = smul.u32 %s27, 8
        %s166 = sld [smem:[#allocation4 + %s165]]
        %s167 = scalar_lea.vmem [#allocation5], %s166
        %v168 = vld [vmem:[%s167] sm:$0x1]
        %vm169 = vcmask 253952
        %170 = vst.msk [vmem:[#allocation2] sm:$0x1] %vm169, %v168
        %s171 = sadd.s32 %s165, 1
        %s172 = sld [smem:[#allocation4 + %s171]]
        %s173 = scalar_lea.vmem [#allocation5], %s172
        %v174 = vld [vmem:[%s173] sm:$0x1]
        %175 = vst.msk [vmem:[#allocation2 + $0x1] sm:$0x1] %vm169, %v174
        %s176 = sadd.s32 %s165, 2
        %s177 = sld [smem:[#allocation4 + %s176]]
        %s178 = scalar_lea.vmem [#allocation5], %s177
        %v179 = vld [vmem:[%s178] sm:$0x1]
        %180 = vst.msk [vmem:[#allocation2 + $0x2] sm:$0x1] %vm169, %v179
        %s181 = sadd.s32 %s165, 3
        %s182 = sld [smem:[#allocation4 + %s181]]
        %s183 = scalar_lea.vmem [#allocation5], %s182
        %v184 = vld [vmem:[%s183] sm:$0x1]
        %185 = vst.msk [vmem:[#allocation2 + $0x3] sm:$0x1] %vm169, %v184
        %s186 = sadd.s32 %s165, 4
        %s187 = sld [smem:[#allocation4 + %s186]]
        %s188 = scalar_lea.vmem [#allocation5], %s187
        %v189 = vld [vmem:[%s188] sm:$0x1]
        %190 = vst.msk [vmem:[#allocation2 + $0x4] sm:$0x1] %vm169, %v189
        %s191 = sadd.s32 %s165, 5
        %s192 = sld [smem:[#allocation4 + %s191]]
        %s193 = scalar_lea.vmem [#allocation5], %s192
        %v194 = vld [vmem:[%s193] sm:$0x1]
        %195 = vst.msk [vmem:[#allocation2 + $0x5] sm:$0x1] %vm169, %v194
        %s196 = sadd.s32 %s165, 6
        %s197 = sld [smem:[#allocation4 + %s196]]
        %s198 = scalar_lea.vmem [#allocation5], %s197
        %v199 = vld [vmem:[%s198] sm:$0x1]
        %200 = vst.msk [vmem:[#allocation2 + $0x6] sm:$0x1] %vm169, %v199
        %s201 = sadd.s32 %s165, 7
        %s202 = sld [smem:[#allocation4 + %s201]]
        %s203 = scalar_lea.vmem [#allocation5], %s202
        %v204 = vld [vmem:[%s203] sm:$0x1]
        %205 = vst.msk [vmem:[#allocation2 + $0x7] sm:$0x1] %vm169, %v204
        %v206 = vld [vmem:[#allocation2] sm:$0xff]
        %v207 = vld [vmem:[#allocation8] sm:$0xff]
        %v208 = vld [vmem:[#allocation8 + $0x8] sm:$0xff]
        %v209 = vld [vmem:[#allocation8 + $0x10] sm:$0xff]
        %v210 = vld [vmem:[#allocation8 + $0x18] sm:$0xff]
        %vm211 = vcmask 261120
        %v213 = vsel %vm211, %v206, 0
        %215 = vmatpush.msra.mxu0 0.0
        %216 = vmatpush.msra.mxu0 0.0
        %217 = vmatpush.msra.mxu0 0.0
        %218 = vmatpush.msra.mxu0 0.0
        %219 = vmatpush.msra.mxu0 0.0
        %220 = vmatpush.msra.mxu0 0.0
        %221 = vmatpush.msra.mxu0 0.0
        %222 = vmatpush.msra.mxu0 0.0
        %223 = vmatpush.msra.mxu0 0.0
        %224 = vmatpush.msra.mxu0 0.0
        %225 = vmatpush.msra.mxu0 0.0
        %226 = vmatpush.msra.mxu0 0.0
        %227 = vmatpush.msra.mxu0 %v210
        %228 = vmatpush.msra.mxu0 %v209
        %229 = vmatpush.msra.mxu0 %v208
        %230 = vmatpush.msra.mxu0 %v207
        %231 = vmatmul.f32.gmra.mxu0 %v213
        %v232 = vpop.f32.mrf.mxu0
        %v233 = vadd.f32 0.0, %v232
        %234 = vdwg.mxu0
        %235 = vst [vmem:[%s164] sm:$0xff] %v233
        %s236 = sand.u32 %s77, 1
        %s237 = scalar_lea.sflag [#allocation7], %s236
        %s238 = sand.u32 %s77, 1
        %s239 = smul.addr %s238, 8
        %s240 = scalar_lea.vmem [#allocation10], %s239
        // Predicated region
        $region37: #{tpu_custom_call.1} parent=27 // pred_check
          %p241 = pneg %p87
        $region38: #{tpu_custom_call.1} parent=27 // pred_check_branch
          %243 = sbr.rel (%p241) target = $region40
        $region39: #{tpu_custom_call.1} parent=27 // pred_region
          %245 = vsyncadd %s237, 0
          %s246 = smul.addr %s27, 8
          %s247 = scalar_lea.hbm %s3, %s246
          %s249 = sshll.u32 %s240, 4
          %s250 = int_to_ptr.vmem [resolvable:$true] %s249
          %s251 = sshll.u32 %s247, 4
          %s252 = int_to_ptr.hbm [resolvable:$true] %s251
          %254 = dma.vmem_to_hbm [thread:$0]  %s250, 128, %s252, %s237
        $region40: #{tpu_custom_call.1} parent=27 // pred_fallthru
          _
      $region28: #{tpu_custom_call.1} parent=5 // pred_fallthru
        _
      %p255 = scmp.le.s32.totalorder 2, %s22
      // Predicated region
      $region41: #{tpu_custom_call.1} parent=5 // pred_check
        %p256 = pneg %p255
      $region42: #{tpu_custom_call.1} parent=5 // pred_check_branch
        %258 = sbr.rel (%p256) target = $region44
      $region43: #{tpu_custom_call.1} parent=5 // pred_region
        %s259 = ssub.s32 %s22, 2
        // Predicated region
        $region45: #{tpu_custom_call.1} parent=43 // pred_check
          %p260 = pneg %p93
        $region46: #{tpu_custom_call.1} parent=43 // pred_check_branch
          %262 = sbr.rel (%p260) target = $region48
        $region47: #{tpu_custom_call.1} parent=43 // pred_region
          %s263 = sand.u32 %s78, 1
          %s264 = scalar_lea.sflag [#allocation7], %s263
          %s265 = sand.u32 %s78, 1
          %s266 = smul.addr %s265, 8
          %s267 = scalar_lea.vmem [#allocation10], %s266
          %269 = dma.done %s264, 128
        $region48: #{tpu_custom_call.1} parent=43 // pred_fallthru
          _
      $region44: #{tpu_custom_call.1} parent=5 // pred_fallthru
        _
    $region6: #{tpu_custom_call.1} parent=1 // loop_footer
      %s26 = sadd.s32 1, %s22
    $region7: #{tpu_custom_call.1} parent=1 // loop_footer_branch
      %21 = sbr.rel target = $region3
    $region8: #{tpu_custom_call.1} parent=1 // loop_exit
      _
    %270 = vsyncpa [#allocation6], 1
    %s271 = scalar_lea.sflag [#allocation6], 1
    %272 = vsyncpa %s271, 1
    %273 = vsyncpa [#allocation9], 1
    %274 = vsyncpa [#allocation7], 1
    %s275 = scalar_lea.sflag [#allocation7], 1
    %276 = vsyncpa %s275, 1

</llo_original>
